<compile_context>
chip_gen: v7x
topology: tpu7x:2x2x1
jax: 0.10.0
libtpu: 0.0.40
codegen_flags: <defaults>
</compile_context>

<pallas_src>
import jax
import jax.numpy as jnp
from jax.experimental import pallas as pl
from jax.experimental.pallas import tpu as pltpu

_NEG = -1e30  # pad-logit bias: exp(_NEG - m) == 0 in f32 -> normalizer unchanged


def _round_up(x, m):
    return ((x + m - 1) // m) * m


def _gru_markov_kernel(x_ref, wih_ref, bgi_ref, bhhn_ref, wout_ref, bout_ref,
                       out_ref):
    gp = bhhn_ref.shape[-1]                       # padded 2H (multiple of 128)
    # Single fused input projection: both directions, all three gates.
    gi = jnp.dot(x_ref[...], wih_ref[...],
                 preferred_element_type=jnp.float32) + bgi_ref[...]   # (tL, 3*gp)
    # Lane-aligned whole-vreg gate slices (offsets 0 / gp / 2*gp).
    r = jax.nn.sigmoid(gi[:, 0 * gp:1 * gp])
    z = jax.nn.sigmoid(gi[:, 1 * gp:2 * gp])
    n = jnp.tanh(gi[:, 2 * gp:3 * gp] + r * bhhn_ref[...])
    hidden = (1.0 - z) * n                        # (tL, gp); pad columns are 0

    # hidden2tag + log_softmax over a lane-dense, tag-padded tile.
    tag = jnp.dot(hidden, wout_ref[...],
                  preferred_element_type=jnp.float32) + bout_ref[...]  # (tL, TP)
    m = jnp.max(tag, axis=1, keepdims=True)
    shifted = tag - m
    lse = jnp.log(jnp.sum(jnp.exp(shifted), axis=1, keepdims=True))
    out_ref[...] = (shifted - lse).astype(out_ref.dtype)


def pack_params(raw, hidden_dim, tag_size):
    """Pack PyTorch-layout GRU/Linear params into the fused, lane-padded kernel
    layout.  `raw` follows nn.GRU / nn.Linear conventions (gate order r, z, n):
        w_ih_f, w_ih_b : (3H, I)     b_ih_*, b_hh_* : (3H,)
        w_out          : (T, 2H)     b_out          : (T,)
    weight_hh_* is not needed (h0 == 0)."""
    H, T = hidden_dim, tag_size
    I = raw["w_ih_f"].shape[1]
    GP = _round_up(2 * H, 128)      # per-gate lane-padded width (fwd|bwd|pad)
    TP = _round_up(T, 128)          # lane-padded tag width

    W_ih = jnp.zeros((I, 3 * GP), jnp.float32)
    b_gi = jnp.zeros((1, 3 * GP), jnp.float32)
    for k in range(3):                                        # 0:r  1:z  2:n
        W_ih = W_ih.at[:, k * GP:k * GP + H].set(raw["w_ih_f"][k * H:(k + 1) * H].T)
        W_ih = W_ih.at[:, k * GP + H:k * GP + 2 * H].set(raw["w_ih_b"][k * H:(k + 1) * H].T)
        bf = raw["b_ih_f"][k * H:(k + 1) * H]
        bb = raw["b_ih_b"][k * H:(k + 1) * H]
        if k < 2:                                             # fold b_hh for r, z
            bf = bf + raw["b_hh_f"][k * H:(k + 1) * H]
            bb = bb + raw["b_hh_b"][k * H:(k + 1) * H]
        b_gi = b_gi.at[0, k * GP:k * GP + H].set(bf)
        b_gi = b_gi.at[0, k * GP + H:k * GP + 2 * H].set(bb)

    b_hh_n = jnp.zeros((1, GP), jnp.float32)
    b_hh_n = b_hh_n.at[0, :H].set(raw["b_hh_f"][2 * H:3 * H])
    b_hh_n = b_hh_n.at[0, H:2 * H].set(raw["b_hh_b"][2 * H:3 * H])

    W_out = jnp.zeros((GP, TP), jnp.float32).at[:2 * H, :T].set(raw["w_out"].T)
    b_out = jnp.full((1, TP), _NEG, jnp.float32).at[0, :T].set(raw["b_out"])

    return {"W_ih": W_ih, "b_gi": b_gi, "b_hh_n": b_hh_n,
            "W_out": W_out, "b_out": b_out, "tag_size": T}


def gru_markov_forward(context, packed, *, tile_rows=256):
    """context: (L, input_size) float32. Returns (L, tag_size) log-probs."""
    L, I = context.shape
    GP = packed["b_hh_n"].shape[-1]
    TP = packed["b_out"].shape[-1]
    T = packed["tag_size"]

    # Row tile: up to 256 rows per grid step; pad rows so the grid divides evenly
    # (rows are independent -> zero padding is harmless, sliced off below).
    tile_L = min(tile_rows, _round_up(L, 8))
    L_pad = _round_up(L, tile_L)
    if L_pad != L:
        context = jnp.pad(context, ((0, L_pad - L), (0, 0)))

    out = pl.pallas_call(
        _gru_markov_kernel,
        out_shape=jax.ShapeDtypeStruct((L_pad, TP), jnp.float32),
        grid=(L_pad // tile_L,),
        in_specs=[
            pl.BlockSpec((tile_L, I), lambda i: (i, 0)),        # x row tile
            pl.BlockSpec((I, 3 * GP), lambda i: (0, 0)),        # fused W_ih (both dirs)
            pl.BlockSpec((1, 3 * GP), lambda i: (0, 0)),        # fused gate bias
            pl.BlockSpec((1, GP), lambda i: (0, 0)),            # b_hh for n gate
            pl.BlockSpec((GP, TP), lambda i: (0, 0)),           # W_out (lane padded)
            pl.BlockSpec((1, TP), lambda i: (0, 0)),            # b_out (lane padded)
        ],
        out_specs=pl.BlockSpec((tile_L, TP), lambda i: (i, 0)),
        compiler_params=pltpu.CompilerParams(
            dimension_semantics=("parallel",),     # shard row tiles on v7x's 2 TCs
            vmem_limit_bytes=32 * 1024 * 1024,     # fits v7x's 64 MiB VMEM w/ headroom
        ),
    )(context, packed["W_ih"], packed["b_gi"], packed["b_hh_n"],
      packed["W_out"], packed["b_out"])
    return out[:L, :T]


def init_raw_params(key, input_size, hidden_dim, tag_size):
    """Deterministic synthetic parameters matching nn.GRU / nn.Linear layouts."""
    ks = jax.random.split(key, 8)
    s = 0.1
    H = hidden_dim
    return {
        "w_ih_f": s * jax.random.normal(ks[0], (3 * H, input_size), jnp.float32),
        "w_ih_b": s * jax.random.normal(ks[1], (3 * H, input_size), jnp.float32),
        "b_ih_f": s * jax.random.normal(ks[2], (3 * H,), jnp.float32),
        "b_hh_f": s * jax.random.normal(ks[3], (3 * H,), jnp.float32),
        "b_ih_b": s * jax.random.normal(ks[4], (3 * H,), jnp.float32),
        "b_hh_b": s * jax.random.normal(ks[5], (3 * H,), jnp.float32),
        "w_out": s * jax.random.normal(ks[6], (tag_size, 2 * hidden_dim), jnp.float32),
        "b_out": s * jax.random.normal(ks[7], (tag_size,), jnp.float32),
    }


def _reference(context, raw, hidden_dim):
    """Pure-JAX reference of the PyTorch forward (PyTorch weight layouts)."""
    H = hidden_dim

    def gru_dir(w_ih, b_ih, b_hh):
        gi = context @ w_ih.T + b_ih
        r = jax.nn.sigmoid(gi[:, :H] + b_hh[:H])
        z = jax.nn.sigmoid(gi[:, H:2 * H] + b_hh[H:2 * H])
        n = jnp.tanh(gi[:, 2 * H:] + r * b_hh[2 * H:])
        return (1.0 - z) * n

    h = jnp.concatenate([gru_dir(raw["w_ih_f"], raw["b_ih_f"], raw["b_hh_f"]),
                         gru_dir(raw["w_ih_b"], raw["b_ih_b"], raw["b_hh_b"])],
                        axis=1)
    tag = h @ raw["w_out"].T + raw["b_out"]
    return jax.nn.log_softmax(tag, axis=1)


if __name__ == "__main__":
    # Small shapes consistent with the module:
    #   embedding_dim = 15 -> input_size = 16, hidden_dim = 32, tag_size = 8, L = 8
    seq_len, embedding_dim, hidden_dim, tag_size = 8, 15, 32, 8
    input_size = embedding_dim + 1

    key = jax.random.PRNGKey(0)
    k_ctx, k_par = jax.random.split(key)
    # context = [embedding ; markov feature], already concatenated upstream.
    context = jax.random.normal(k_ctx, (seq_len, input_size), jnp.float32)
    raw = init_raw_params(k_par, input_size, hidden_dim, tag_size)
    packed = pack_params(raw, hidden_dim, tag_size)

    tag_scores = gru_markov_forward(context, packed)
    tag_scores = jax.block_until_ready(tag_scores)

    ref = _reference(context, raw, hidden_dim)
    assert tag_scores.shape == (seq_len, tag_size)
    assert jnp.allclose(tag_scores, ref, atol=1e-5, rtol=1e-5), "mismatch vs reference"
    print("KERNEL_OK")
</pallas_src>

<mosaic_0001>
module attributes {stable_mosaic.version = 11 : i64} {
  func.func @_gru_markov_kernel(%arg0: i32, %arg1: memref<8x16xf32, #tpu.memory_space<vmem>>, %arg2: memref<16x384xf32, #tpu.memory_space<vmem>>, %arg3: memref<1x384xf32, #tpu.memory_space<vmem>>, %arg4: memref<1x128xf32, #tpu.memory_space<vmem>>, %arg5: memref<128x128xf32, #tpu.memory_space<vmem>>, %arg6: memref<1x128xf32, #tpu.memory_space<vmem>>, %arg7: memref<8x128xf32, #tpu.memory_space<vmem>>) attributes {dimension_semantics = [#tpu.dimension_semantics<parallel>], iteration_bounds = array<i64: 1>, scalar_prefetch = 0 : i64, scratch_operands = 0 : i64, tpu.core_type = #tpu.core_type<tc>, window_params = [{transform_indices = @transform_0, window_bounds = array<i64: 8, 16>}, {pipeline_mode = #tpu.pipeline_mode<synchronous>, transform_indices = @transform_1, window_bounds = array<i64: 16, 384>}, {pipeline_mode = #tpu.pipeline_mode<synchronous>, transform_indices = @transform_2, window_bounds = array<i64: 1, 384>}, {pipeline_mode = #tpu.pipeline_mode<synchronous>, transform_indices = @transform_3, window_bounds = array<i64: 1, 128>}, {pipeline_mode = #tpu.pipeline_mode<synchronous>, transform_indices = @transform_4, window_bounds = array<i64: 128, 128>}, {pipeline_mode = #tpu.pipeline_mode<synchronous>, transform_indices = @transform_5, window_bounds = array<i64: 1, 128>}, {transform_indices = @transform_6, window_bounds = array<i64: 8, 128>}]} {
    %c0 = arith.constant 0 : index
    %c0_0 = arith.constant 0 : index
    %0 = vector.load %arg1[%c0, %c0_0] : memref<8x16xf32, #tpu.memory_space<vmem>>, vector<8x16xf32>
    %c0_1 = arith.constant 0 : index
    %c0_2 = arith.constant 0 : index
    %1 = vector.load %arg2[%c0_1, %c0_2] : memref<16x384xf32, #tpu.memory_space<vmem>>, vector<16x384xf32>
    %cst = arith.constant dense<0.000000e+00> : vector<8x384xf32>
    %2 = tpu.matmul %0, %1, %cst {dimension_numbers = #tpu.dot_dimension_numbers<[1], [0], [0], [1], [0, 0, 1, 1], [], []>} : vector<8x16xf32>, vector<16x384xf32>, vector<8x384xf32> -> vector<8x384xf32>
    %c0_3 = arith.constant 0 : index
    %c0_4 = arith.constant 0 : index
    %3 = vector.load %arg3[%c0_3, %c0_4] : memref<1x384xf32, #tpu.memory_space<vmem>>, vector<1x384xf32>
    %4 = vector.broadcast %3 : vector<1x384xf32> to vector<8x384xf32>
    %5 = arith.addf %2, %4 : vector<8x384xf32>
    %6 = vector.extract_strided_slice %5 {offsets = [0, 0], sizes = [8, 128], strides = [1, 1]} : vector<8x384xf32> to vector<8x128xf32>
    %7 = arith.negf %6 : vector<8x128xf32>
    %8 = math.exp %7 : vector<8x128xf32>
    %cst_5 = arith.constant 1.000000e+00 : f32
    %9 = vector.broadcast %cst_5 : f32 to vector<8x128xf32>
    %10 = arith.addf %9, %8 : vector<8x128xf32>
    %11 = arith.divf %9, %10 : vector<8x128xf32>
    %12 = vector.extract_strided_slice %5 {offsets = [0, 128], sizes = [8, 128], strides = [1, 1]} : vector<8x384xf32> to vector<8x128xf32>
    %13 = arith.negf %12 : vector<8x128xf32>
    %14 = math.exp %13 : vector<8x128xf32>
    %cst_6 = arith.constant 1.000000e+00 : f32
    %15 = vector.broadcast %cst_6 : f32 to vector<8x128xf32>
    %16 = arith.addf %15, %14 : vector<8x128xf32>
    %17 = arith.divf %15, %16 : vector<8x128xf32>
    %18 = vector.extract_strided_slice %5 {offsets = [0, 256], sizes = [8, 128], strides = [1, 1]} : vector<8x384xf32> to vector<8x128xf32>
    %c0_7 = arith.constant 0 : index
    %c0_8 = arith.constant 0 : index
    %19 = vector.load %arg4[%c0_7, %c0_8] : memref<1x128xf32, #tpu.memory_space<vmem>>, vector<1x128xf32>
    %20 = vector.broadcast %19 : vector<1x128xf32> to vector<8x128xf32>
    %21 = arith.mulf %11, %20 : vector<8x128xf32>
    %22 = arith.addf %18, %21 : vector<8x128xf32>
    %23 = math.tanh %22 : vector<8x128xf32>
    %cst_9 = arith.constant 1.000000e+00 : f32
    %24 = vector.broadcast %cst_9 : f32 to vector<8x128xf32>
    %25 = arith.subf %24, %17 : vector<8x128xf32>
    %26 = arith.mulf %25, %23 : vector<8x128xf32>
    %c0_10 = arith.constant 0 : index
    %c0_11 = arith.constant 0 : index
    %27 = vector.load %arg5[%c0_10, %c0_11] : memref<128x128xf32, #tpu.memory_space<vmem>>, vector<128x128xf32>
    %cst_12 = arith.constant dense<0.000000e+00> : vector<8x128xf32>
    %28 = tpu.matmul %26, %27, %cst_12 {dimension_numbers = #tpu.dot_dimension_numbers<[1], [0], [0], [1], [0, 0, 1, 1], [], []>} : vector<8x128xf32>, vector<128x128xf32>, vector<8x128xf32> -> vector<8x128xf32>
    %c0_13 = arith.constant 0 : index
    %c0_14 = arith.constant 0 : index
    %29 = vector.load %arg6[%c0_13, %c0_14] : memref<1x128xf32, #tpu.memory_space<vmem>>, vector<1x128xf32>
    %30 = vector.broadcast %29 : vector<1x128xf32> to vector<8x128xf32>
    %31 = arith.addf %28, %30 : vector<8x128xf32>
    %cst_15 = arith.constant dense<0xFF800000> : vector<8xf32>
    %32 = vector.multi_reduction <maximumf>, %31, %cst_15 [1] : vector<8x128xf32> to vector<8xf32>
    %33 = vector.shape_cast %32 : vector<8xf32> to vector<8x1xf32>
    %34 = vector.broadcast %33 : vector<8x1xf32> to vector<8x128xf32>
    %35 = arith.subf %31, %34 : vector<8x128xf32>
    %36 = math.exp %35 : vector<8x128xf32>
    %cst_16 = arith.constant dense<0.000000e+00> : vector<8xf32>
    %37 = vector.multi_reduction <add>, %36, %cst_16 [1] : vector<8x128xf32> to vector<8xf32>
    %38 = vector.shape_cast %37 : vector<8xf32> to vector<8x1xf32>
    %39 = math.log %38 : vector<8x1xf32>
    %40 = vector.broadcast %39 : vector<8x1xf32> to vector<8x128xf32>
    %41 = arith.subf %35, %40 : vector<8x128xf32>
    %c0_17 = arith.constant 0 : index
    %c0_18 = arith.constant 0 : index
    %42 = vector.load %arg7[%c0_17, %c0_18] : memref<8x128xf32, #tpu.memory_space<vmem>>, vector<8x128xf32>
    tpu.vector_store %arg7[%c0_17, %c0_18], %41 {strides = array<i32>} : memref<8x128xf32, #tpu.memory_space<vmem>>, vector<8x128xf32>,
    return
  }
  func.func @transform_0(%arg0: i32) -> (i32, i32) {
    %c0_i32 = arith.constant 0 : i32
    %c0_i32_0 = arith.constant 0 : i32
    return %arg0, %c0_i32 : i32, i32
  }
  func.func @transform_1(%arg0: i32) -> (i32, i32) {
    %c0_i32 = arith.constant 0 : i32
    %c0_i32_0 = arith.constant 0 : i32
    %c0_i32_1 = arith.constant 0 : i32
    return %c0_i32, %c0_i32_0 : i32, i32
  }
  func.func @transform_2(%arg0: i32) -> (i32, i32) {
    %c0_i32 = arith.constant 0 : i32
    %c0_i32_0 = arith.constant 0 : i32
    %c0_i32_1 = arith.constant 0 : i32
    return %c0_i32, %c0_i32_0 : i32, i32
  }
  func.func @transform_3(%arg0: i32) -> (i32, i32) {
    %c0_i32 = arith.constant 0 : i32
    %c0_i32_0 = arith.constant 0 : i32
    %c0_i32_1 = arith.constant 0 : i32
    return %c0_i32, %c0_i32_0 : i32, i32
  }
  func.func @transform_4(%arg0: i32) -> (i32, i32) {
    %c0_i32 = arith.constant 0 : i32
    %c0_i32_0 = arith.constant 0 : i32
    %c0_i32_1 = arith.constant 0 : i32
    return %c0_i32, %c0_i32_0 : i32, i32
  }
  func.func @transform_5(%arg0: i32) -> (i32, i32) {
    %c0_i32 = arith.constant 0 : i32
    %c0_i32_0 = arith.constant 0 : i32
    %c0_i32_1 = arith.constant 0 : i32
    return %c0_i32, %c0_i32_0 : i32, i32
  }
  func.func @transform_6(%arg0: i32) -> (i32, i32) {
    %c0_i32 = arith.constant 0 : i32
    %c0_i32_0 = arith.constant 0 : i32
    return %arg0, %c0_i32 : i32, i32
  }
}

</mosaic_0001>

<llo_original>
// kernel: tpu_custom_call.1
$region0: #{tpu_custom_call.1}
  #allocation0 [shape = 'u32[]', space=smem, size = 0x4, offset = 0x4, fixed_abs, tag = 'smem constant byte address 0x4 - core index']
  #allocation1 [shape = 'u32[144,128]{1,0:T(1,128)}', space=vmem, size = 0x12000, scoped, tag = 'internal scratch']
  %s0 = inlined_call_operand.hbm [shape: f32[8,16], index: 0, kind: input, shape index: {}]
  %s1 = inlined_call_operand.hbm [shape: f32[16,384], index: 1, kind: input, shape index: {}]
  %s2 = inlined_call_operand.vmem [shape: f32[1,384], index: 2, kind: input, shape index: {}]
  %s3 = inlined_call_operand.vmem [shape: f32[1,128], index: 3, kind: input, shape index: {}]
  %s4 = inlined_call_operand.hbm [shape: f32[128,128], index: 4, kind: input, shape index: {}]
  %s5 = inlined_call_operand.vmem [shape: f32[1,128], index: 5, kind: input, shape index: {}]
  %s6 = inlined_call_operand.hbm [shape: f32[8,128], index: 6, kind: output, shape index: {}]
  %s7 = sld [smem:[#allocation0]]
  $region46: #{tpu_custom_call.1} parent=0
    _
  %s9 = ssub.s32 1, %s7
  %s10 = scalar_select 0, %s9, %s7
  $region1: #{tpu_custom_call.1} parent=0
    #allocation2 [shape = 'u8[4096]{0}', space=vmem, size = 0x1000, scoped, tag = 'input window, operand 0, single buffered']
    #allocation3 [shape = 's32[1]{0}', space=sflag, size = 0x4, scoped, tag = 'scoped memory for tpu_custom_call.1']
    #allocation4 [shape = 's32[1]{0}', space=sflag, size = 0x4, scoped, tag = 'scoped memory for tpu_custom_call.1']
    #allocation5 [shape = 'u8[24576]{0}', space=vmem, size = 0x6000, scoped, tag = 'input window, operand 1, single buffered']
    #allocation6 [shape = 's32[1]{0}', space=sflag, size = 0x4, scoped, tag = 'scoped memory for tpu_custom_call.1']
    #allocation7 [shape = 'u8[65536]{0}', space=vmem, size = 0x10000, scoped, tag = 'input window, operand 4, single buffered']
    #allocation8 [shape = 'u8[4096]{0}', space=vmem, size = 0x1000, scoped, tag = 'output window, operand 0, single buffered']
    %11 = vsyncpa [#allocation3], 0
    %12 = vsyncpa [#allocation6], 0
    %13 = vsyncpa [#allocation4], 0
    // Predicated region
    $region2: #{tpu_custom_call.1} parent=1 // pred_check
      _
    $region3: #{tpu_custom_call.1} parent=1 // pred_check_branch
      %15 = sbr.rel (0) target = $region5
    $region4: #{tpu_custom_call.1} parent=1 // pred_region
      %s17 = ssub.s32 128, 128
      %18 = vsyncadd [#allocation3], %s17
      %s20 = sshll.u32 [#allocation2], 4
      %s21 = int_to_ptr.vmem [resolvable:$true] %s20
      %23 = dma.hbm_to_vmem [thread:$0]  %s0, 128, %s21, [#allocation3]
    $region5: #{tpu_custom_call.1} parent=1 // pred_fallthru
      _
    // Predicated region
    $region6: #{tpu_custom_call.1} parent=1 // pred_check
      _
    $region7: #{tpu_custom_call.1} parent=1 // pred_check_branch
      %25 = sbr.rel (0) target = $region9
    $region8: #{tpu_custom_call.1} parent=1 // pred_region
      %s27 = ssub.s32 768, 768
      %28 = vsyncadd [#allocation6], %s27
      %s29 = sshll.u32 [#allocation5], 4
      %s30 = int_to_ptr.vmem [resolvable:$true] %s29
      %35 = dma.hbm_to_vmem [thread:$0]  %s1, 768, %s30, [#allocation6], 384, 384, 24
    $region9: #{tpu_custom_call.1} parent=1 // pred_fallthru
      _
    // Predicated region
    $region10: #{tpu_custom_call.1} parent=1 // pred_check
      _
    $region11: #{tpu_custom_call.1} parent=1 // pred_check_branch
      %37 = sbr.rel (0) target = $region13
    $region12: #{tpu_custom_call.1} parent=1 // pred_region
      _
    $region13: #{tpu_custom_call.1} parent=1 // pred_fallthru
      _
    // Predicated region
    $region14: #{tpu_custom_call.1} parent=1 // pred_check
      _
    $region15: #{tpu_custom_call.1} parent=1 // pred_check_branch
      %39 = sbr.rel (0) target = $region17
    $region16: #{tpu_custom_call.1} parent=1 // pred_region
      _
    $region17: #{tpu_custom_call.1} parent=1 // pred_fallthru
      _
    // Predicated region
    $region18: #{tpu_custom_call.1} parent=1 // pred_check
      _
    $region19: #{tpu_custom_call.1} parent=1 // pred_check_branch
      %41 = sbr.rel (0) target = $region21
    $region20: #{tpu_custom_call.1} parent=1 // pred_region
      %s43 = ssub.s32 2048, 2048
      %44 = vsyncadd [#allocation6], %s43
      %s45 = sshll.u32 [#allocation7], 4
      %s46 = int_to_ptr.vmem [resolvable:$true] %s45
      %51 = dma.hbm_to_vmem [thread:$0]  %s4, 2048, %s46, [#allocation6], 128, 128, 8
    $region21: #{tpu_custom_call.1} parent=1 // pred_fallthru
      _
    // Predicated region
    $region22: #{tpu_custom_call.1} parent=1 // pred_check
      _
    $region23: #{tpu_custom_call.1} parent=1 // pred_check_branch
      %53 = sbr.rel (0) target = $region25
    $region24: #{tpu_custom_call.1} parent=1 // pred_region
      _
    $region25: #{tpu_custom_call.1} parent=1 // pred_fallthru
      _
    // Predicated region
    $region26: #{tpu_custom_call.1} parent=1 // pred_check
      _
    $region27: #{tpu_custom_call.1} parent=1 // pred_check_branch
      %55 = sbr.rel (0) target = $region29
    $region28: #{tpu_custom_call.1} parent=1 // pred_region
      %56 = dma.done [#allocation3], 128
    $region29: #{tpu_custom_call.1} parent=1 // pred_fallthru
      _
    // Predicated region
    $region30: #{tpu_custom_call.1} parent=1 // pred_check
      _
    $region31: #{tpu_custom_call.1} parent=1 // pred_check_branch
      %58 = sbr.rel (0) target = $region33
    $region32: #{tpu_custom_call.1} parent=1 // pred_region
      %59 = dma.done [#allocation6], 768
    $region33: #{tpu_custom_call.1} parent=1 // pred_fallthru
      _
    // Predicated region
    $region34: #{tpu_custom_call.1} parent=1 // pred_check
      _
    $region35: #{tpu_custom_call.1} parent=1 // pred_check_branch
      %61 = sbr.rel (0) target = $region37
    $region36: #{tpu_custom_call.1} parent=1 // pred_region
      %62 = dma.done [#allocation6], 2048
    $region37: #{tpu_custom_call.1} parent=1 // pred_fallthru
      _
    %v63 = vld [vmem:[#allocation2] sm:$0xff]
    %v64 = vld [vmem:[#allocation5] sm:$0xff]
    %v65 = vld [vmem:[#allocation5 + $0x8] sm:$0xff]
    %v66 = vld [vmem:[#allocation5 + $0x10] sm:$0xff]
    %v67 = vld [vmem:[#allocation5 + $0x18] sm:$0xff]
    %v68 = vld [vmem:[#allocation5 + $0x20] sm:$0xff]
    %v69 = vld [vmem:[#allocation5 + $0x28] sm:$0xff]
    %v70 = vld [vmem:[%s2] sm:$0x7]
    %v72 = vlaneseq
    %v73 = vshrl.u32 %v72, 7
    %v74 = vsub.s32 0, %v73
    %v75 = vrot.slane %v70, %v74
    %v76 = vlaneseq
    %v77 = vshrl.u32 %v76, 7
    %v78 = vsub.s32 1, %v77
    %v79 = vrot.slane %v70, %v78
    %v80 = vlaneseq
    %v81 = vshrl.u32 %v80, 7
    %v82 = vsub.s32 2, %v81
    %v83 = vrot.slane %v70, %v82
    %vm87 = vcmask 130048
    %v89 = vsel %vm87, %v63, 0
    %91 = vmatprep.subr.mxu0 %v65
    %92 = vmatpush1.msra.mxu0 %v64
    %93 = vmatprep.subr.mxu0 %v68
    %94 = vmatpush1.msra.mxu0 %v67
    %95 = vmatprep.subr.mxu0 0.0
    %96 = vmatpush1.msra.mxu0 0.0
    %97 = vmatprep.subr.mxu0 0.0
    %98 = vmatpush1.msra.mxu0 0.0
    %99 = vmatprep.subr.mxu0 0.0
    %100 = vmatpush1.msra.mxu0 0.0
    %101 = vmatprep.subr.mxu0 0.0
    %102 = vmatpush1.msra.mxu0 0.0
    %103 = vmatprep.subr.mxu0 0.0
    %104 = vmatpush1.msra.mxu0 0.0
    %105 = vmatprep.subr.mxu0 0.0
    %106 = vmatpush1.msra.mxu0 0.0
    %107 = vmatprep.subr.mxu0 0.0
    %108 = vmatpush1.msra.mxu0 0.0
    %109 = vmatprep.subr.mxu0 0.0
    %110 = vmatpush1.msra.mxu0 0.0
    %111 = vmatprep.subr.mxu0 0.0
    %112 = vmatpush1.msra.mxu0 0.0
    %113 = vmatprep.subr.mxu0 0.0
    %114 = vmatpush1.msra.mxu0 0.0
    %115 = vmatprep.subr.mxu0 0.0
    %116 = vmatpush1.msra.mxu0 0.0
    %117 = vmatprep.subr.mxu0 0.0
    %118 = vmatpush1.msra.mxu0 0.0
    %119 = vmatprep.subr.mxu0 0.0
    %120 = vmatpush1.msra.mxu0 0.0
    %121 = vmatprep.subr.mxu0 0.0
    %122 = vmatpush1.msra.mxu0 0.0
    %123 = vmatprep.subr.mxu0 0.0
    %124 = vmatpush1.msra.mxu0 0.0
    %125 = vmatprep.subr.mxu0 0.0
    %126 = vmatpush1.msra.mxu0 0.0
    %127 = vmatprep.subr.mxu0 0.0
    %128 = vmatpush1.msra.mxu0 0.0
    %129 = vmatprep.subr.mxu0 0.0
    %130 = vmatpush1.msra.mxu0 0.0
    %131 = vmatprep.subr.mxu0 0.0
    %132 = vmatpush1.msra.mxu0 0.0
    %133 = vmatprep.subr.mxu0 0.0
    %134 = vmatpush1.msra.mxu0 0.0
    %135 = vmatprep.subr.mxu0 0.0
    %136 = vmatpush1.msra.mxu0 0.0
    %137 = vmatprep.subr.mxu0 0.0
    %138 = vmatpush1.msra.mxu0 0.0
    %139 = vmatprep.subr.mxu0 0.0
    %140 = vmatpush1.msra.mxu0 0.0
    %141 = vmatprep.subr.mxu0 0.0
    %142 = vmatpush1.msra.mxu0 0.0
    %143 = vmatprep.subr.mxu0 0.0
    %144 = vmatpush1.msra.mxu0 0.0
    %145 = vmatprep.subr.mxu0 0.0
    %146 = vmatpush1.msra.mxu0 0.0
    %147 = vmatprep.subr.mxu0 0.0
    %148 = vmatpush1.msra.mxu0 0.0
    %149 = vmatprep.subr.mxu0 0.0
    %150 = vmatpush1.msra.mxu0 0.0
    %151 = vmatprep.subr.mxu0 0.0
    %152 = vmatpush1.msra.mxu0 0.0
    %153 = vmatprep.subr.mxu0 0.0
    %154 = vmatpush1.msra.mxu0 0.0
    %155 = vmatprep.mubr.f32.mxu0 0.0
    %156 = vmatmul.mubr.f32.gmra.mrb[0].mxu0 %v89
    %v157 = vpop.f32.mrb[0].mxu0
    %v158 = vadd.f32 %v75, %v157
    %v159 = vpop.f32.mrb[0].mxu0
    %v160 = vadd.f32 %v79, %v159
    %161 = vdwg.mxu0
    %162 = vmatprep.subr.mxu0 0.0
    %163 = vmatpush1.msra.mxu0 %v66
    %164 = vmatprep.subr.mxu0 0.0
    %165 = vmatpush1.msra.mxu0 %v69
    %166 = vmatprep.subr.mxu0 0.0
    %167 = vmatpush1.msra.mxu0 0.0
    %168 = vmatprep.subr.mxu0 0.0
    %169 = vmatpush1.msra.mxu0 0.0
    %170 = vmatprep.subr.mxu0 0.0
    %171 = vmatpush1.msra.mxu0 0.0
    %172 = vmatprep.subr.mxu0 0.0
    %173 = vmatpush1.msra.mxu0 0.0
    %174 = vmatprep.subr.mxu0 0.0
    %175 = vmatpush1.msra.mxu0 0.0
    %176 = vmatprep.subr.mxu0 0.0
    %177 = vmatpush1.msra.mxu0 0.0
    %178 = vmatprep.subr.mxu0 0.0
    %179 = vmatpush1.msra.mxu0 0.0
    %180 = vmatprep.subr.mxu0 0.0
    %181 = vmatpush1.msra.mxu0 0.0
    %182 = vmatprep.subr.mxu0 0.0
    %183 = vmatpush1.msra.mxu0 0.0
    %184 = vmatprep.subr.mxu0 0.0
    %185 = vmatpush1.msra.mxu0 0.0
    %186 = vmatprep.subr.mxu0 0.0
    %187 = vmatpush1.msra.mxu0 0.0
    %188 = vmatprep.subr.mxu0 0.0
    %189 = vmatpush1.msra.mxu0 0.0
    %190 = vmatprep.subr.mxu0 0.0
    %191 = vmatpush1.msra.mxu0 0.0
    %192 = vmatprep.subr.mxu0 0.0
    %193 = vmatpush1.msra.mxu0 0.0
    %194 = vmatprep.subr.mxu0 0.0
    %195 = vmatpush1.msra.mxu0 0.0
    %196 = vmatprep.subr.mxu0 0.0
    %197 = vmatpush1.msra.mxu0 0.0
    %198 = vmatprep.subr.mxu0 0.0
    %199 = vmatpush1.msra.mxu0 0.0
    %200 = vmatprep.subr.mxu0 0.0
    %201 = vmatpush1.msra.mxu0 0.0
    %202 = vmatprep.subr.mxu0 0.0
    %203 = vmatpush1.msra.mxu0 0.0
    %204 = vmatprep.subr.mxu0 0.0
    %205 = vmatpush1.msra.mxu0 0.0
    %206 = vmatprep.subr.mxu0 0.0
    %207 = vmatpush1.msra.mxu0 0.0
    %208 = vmatprep.subr.mxu0 0.0
    %209 = vmatpush1.msra.mxu0 0.0
    %210 = vmatprep.subr.mxu0 0.0
    %211 = vmatpush1.msra.mxu0 0.0
    %212 = vmatprep.subr.mxu0 0.0
    %213 = vmatpush1.msra.mxu0 0.0
    %214 = vmatprep.subr.mxu0 0.0
    %215 = vmatpush1.msra.mxu0 0.0
    %216 = vmatprep.subr.mxu0 0.0
    %217 = vmatpush1.msra.mxu0 0.0
    %218 = vmatprep.subr.mxu0 0.0
    %219 = vmatpush1.msra.mxu0 0.0
    %220 = vmatprep.subr.mxu0 0.0
    %221 = vmatpush1.msra.mxu0 0.0
    %222 = vmatprep.subr.mxu0 0.0
    %223 = vmatpush1.msra.mxu0 0.0
    %224 = vmatprep.subr.mxu0 0.0
    %225 = vmatpush1.msra.mxu0 0.0
    %226 = vmatprep.mubr.f32.mxu0 0.0
    %227 = vmatmul.mubr.f32.gmra.mrb[0].mxu0 %v89
    %v228 = vpop.f32.mrb[0].mxu0
    %v229 = vadd.f32 %v83, %v228
    %v230 = vpop.f32.mrb[0].mxu0
    %231 = vdwg.mxu0
    %v232 = vxor.u32 %v158, 2147483648
    %v233 = vmul.f32 %v232, 1.442695
    %v234 = vpow.pop %v233
    %v235 = vadd.f32 %v234, 1.0
    %v236 = vrcp.pop %v235
    %v237 = vmul.f32 1.0, %v236
    %v238 = vxor.u32 %v160, 2147483648
    %v239 = vmul.f32 %v238, 1.442695
    %v240 = vpow.pop %v239
    %v241 = vadd.f32 %v240, 1.0
    %v242 = vrcp.pop %v241
    %v243 = vmul.f32 1.0, %v242
    %v244 = vld [vmem:[%s3] sm:$0x1]
    %v246 = vlaneseq
    %v247 = vshrl.u32 %v246, 7
    %v248 = vsub.s32 0, %v247
    %v249 = vrot.slane %v244, %v248
    %v251 = vmul.f32 %v237, %v249
    %v252 = vadd.f32 %v229, %v251
    %v253 = vtanh.pop %v252
    %v254 = vsub.f32 1.0, %v243
    %v255 = vmul.f32 %v254, %v253
    %v256 = vld [vmem:[#allocation7] sm:$0xff]
    %v257 = vld [vmem:[#allocation7 + $0x8] sm:$0xff]
    %v258 = vld [vmem:[#allocation7 + $0x10] sm:$0xff]
    %v259 = vld [vmem:[#allocation7 + $0x18] sm:$0xff]
    %v260 = vld [vmem:[#allocation7 + $0x20] sm:$0xff]
    %v261 = vld [vmem:[#allocation7 + $0x28] sm:$0xff]
    %v262 = vld [vmem:[#allocation7 + $0x30] sm:$0xff]
    %v263 = vld [vmem:[#allocation7 + $0x38] sm:$0xff]
    %v264 = vld [vmem:[#allocation7 + $0x40] sm:$0xff]
    %v265 = vld [vmem:[#allocation7 + $0x48] sm:$0xff]
    %v266 = vld [vmem:[#allocation7 + $0x50] sm:$0xff]
    %v267 = vld [vmem:[#allocation7 + $0x58] sm:$0xff]
    %v268 = vld [vmem:[#allocation7 + $0x60] sm:$0xff]
    %v269 = vld [vmem:[#allocation7 + $0x68] sm:$0xff]
    %v270 = vld [vmem:[#allocation7 + $0x70] sm:$0xff]
    %v271 = vld [vmem:[#allocation7 + $0x78] sm:$0xff]
    %v272 = vld [vmem:[%s5] sm:$0x1]
    %v274 = vlaneseq
    %v275 = vshrl.u32 %v274, 7
    %v276 = vsub.s32 0, %v275
    %v277 = vrot.slane %v272, %v276
    %279 = vmatprep.subr.mxu0 0.0
    %280 = vmatpush1.msra.mxu0 %v256
    %281 = vmatprep.subr.mxu0 0.0
    %282 = vmatpush1.msra.mxu0 %v257
    %283 = vmatprep.subr.mxu0 0.0
    %284 = vmatpush1.msra.mxu0 %v258
    %285 = vmatprep.subr.mxu0 0.0
    %286 = vmatpush1.msra.mxu0 %v259
    %287 = vmatprep.subr.mxu0 0.0
    %288 = vmatpush1.msra.mxu0 %v260
    %289 = vmatprep.subr.mxu0 0.0
    %290 = vmatpush1.msra.mxu0 %v261
    %291 = vmatprep.subr.mxu0 0.0
    %292 = vmatpush1.msra.mxu0 %v262
    %293 = vmatprep.subr.mxu0 0.0
    %294 = vmatpush1.msra.mxu0 %v263
    %295 = vmatprep.subr.mxu0 0.0
    %296 = vmatpush1.msra.mxu0 %v264
    %297 = vmatprep.subr.mxu0 0.0
    %298 = vmatpush1.msra.mxu0 %v265
    %299 = vmatprep.subr.mxu0 0.0
    %300 = vmatpush1.msra.mxu0 %v266
    %301 = vmatprep.subr.mxu0 0.0
    %302 = vmatpush1.msra.mxu0 %v267
    %303 = vmatprep.subr.mxu0 0.0
    %304 = vmatpush1.msra.mxu0 %v268
    %305 = vmatprep.subr.mxu0 0.0
    %306 = vmatpush1.msra.mxu0 %v269
    %307 = vmatprep.subr.mxu0 0.0
    %308 = vmatpush1.msra.mxu0 %v270
    %309 = vmatprep.subr.mxu0 0.0
    %310 = vmatpush1.msra.mxu0 %v271
    %311 = vmatprep.subr.mxu0 0.0
    %312 = vmatpush1.msra.mxu0 0.0
    %313 = vmatprep.subr.mxu0 0.0
    %314 = vmatpush1.msra.mxu0 0.0
    %315 = vmatprep.subr.mxu0 0.0
    %316 = vmatpush1.msra.mxu0 0.0
    %317 = vmatprep.subr.mxu0 0.0
    %318 = vmatpush1.msra.mxu0 0.0
    %319 = vmatprep.subr.mxu0 0.0
    %320 = vmatpush1.msra.mxu0 0.0
    %321 = vmatprep.subr.mxu0 0.0
    %322 = vmatpush1.msra.mxu0 0.0
    %323 = vmatprep.subr.mxu0 0.0
    %324 = vmatpush1.msra.mxu0 0.0
    %325 = vmatprep.subr.mxu0 0.0
    %326 = vmatpush1.msra.mxu0 0.0
    %327 = vmatprep.subr.mxu0 0.0
    %328 = vmatpush1.msra.mxu0 0.0
    %329 = vmatprep.subr.mxu0 0.0
    %330 = vmatpush1.msra.mxu0 0.0
    %331 = vmatprep.subr.mxu0 0.0
    %332 = vmatpush1.msra.mxu0 0.0
    %333 = vmatprep.subr.mxu0 0.0
    %334 = vmatpush1.msra.mxu0 0.0
    %335 = vmatprep.subr.mxu0 0.0
    %336 = vmatpush1.msra.mxu0 0.0
    %337 = vmatprep.subr.mxu0 0.0
    %338 = vmatpush1.msra.mxu0 0.0
    %339 = vmatprep.subr.mxu0 0.0
    %340 = vmatpush1.msra.mxu0 0.0
    %341 = vmatprep.subr.mxu0 0.0
    %342 = vmatpush1.msra.mxu0 0.0
    %343 = vmatprep.mubr.f32.mxu0 0.0
    %344 = vmatmul.mubr.f32.gmra.mrb[0].mxu0 %v255
    %v345 = vpop.f32.mrb[0].mxu0
    %v346 = vadd.f32 %v277, %v345
    %v347 = vpop.f32.mrb[0].mxu0
    %348 = vdwg.mxu0
    %349 = vmax.xlane.f32.xlu0 %v346
    %v350 = vpop.xlane.xlu0 %349
    %v351 = vsub.f32 %v346, %v350
    %v352 = vmul.f32 %v351, 1.442695
    %v353 = vpow.pop %v352
    %354 = vadd.xlane.f32.xlu0 %v353
    %v355 = vpop.xlane.xlu0 %354
    %v356 = vlog2.pop %v355
    %v357 = vmul.f32 %v356, 0.6931472
    %v358 = vsub.f32 %v351, %v357
    %359 = vst [vmem:[#allocation8] sm:$0xff] %v358
    // Predicated region
    $region38: #{tpu_custom_call.1} parent=1 // pred_check
      _
    $region39: #{tpu_custom_call.1} parent=1 // pred_check_branch
      %361 = sbr.rel (0) target = $region41
    $region40: #{tpu_custom_call.1} parent=1 // pred_region
      %s363 = ssub.s32 128, 128
      %364 = vsyncadd [#allocation4], %s363
      %s366 = sshll.u32 [#allocation8], 4
      %s367 = int_to_ptr.vmem [resolvable:$true] %s366
      %369 = dma.vmem_to_hbm [thread:$0]  %s367, 128, %s6, [#allocation4]
    $region41: #{tpu_custom_call.1} parent=1 // pred_fallthru
      _
    // Predicated region
    $region42: #{tpu_custom_call.1} parent=1 // pred_check
      _
    $region43: #{tpu_custom_call.1} parent=1 // pred_check_branch
      %371 = sbr.rel (0) target = $region45
    $region44: #{tpu_custom_call.1} parent=1 // pred_region
      %372 = dma.done [#allocation4], 128
    $region45: #{tpu_custom_call.1} parent=1 // pred_fallthru
      _
    %373 = vsyncpa [#allocation3], 1
    %374 = vsyncpa [#allocation6], 1
    %375 = vsyncpa [#allocation4], 1

</llo_original>
